<compile_context>
chip_gen: v6e
topology: v6e:2x2x1
jax: 0.10.0
libtpu: 0.0.40
codegen_flags: <defaults>
</compile_context>

<pallas_src>
import jax
import jax.numpy as jnp
from jax.experimental import pallas as pl
from jax.experimental.pallas import tpu as pltpu

_LANE = 128
_TN_MAX = 2048  # (tb, 2048) f32 tile = 64 KiB per buffer -> safe with double-buffering on v7x


def _round_up(x, m):
    return (x + m - 1) // m * m


def _loss_sums(logits_flat, targets_flat):
    """Per-batch partial sums, shape (5, B) f32:
       [bce_sum, focal_sum, intersection, prob_sum, target_sum]."""
    B, n_true = logits_flat.shape

    tn = min(_TN_MAX, _round_up(n_true, _LANE))
    n_pad = _round_up(n_true, tn)
    if n_pad != n_true:
        pad = n_pad - n_true
        logits_flat = jnp.pad(logits_flat, ((0, 0), (0, pad)))
        targets_flat = jnp.pad(targets_flat, ((0, 0), (0, pad)))   # zero-padded targets
    need_mask = n_pad != n_true

    tb = 8 if (B % 8 == 0) else B
    nb = B // tb
    nk = n_pad // tn

    def kernel(x_ref, t_ref, out_ref, a_bce, a_foc, a_int, a_p, a_t):
        k = pl.program_id(1)

        @pl.when(k == 0)
        def _init():
            a_bce[...] = jnp.zeros_like(a_bce)
            a_foc[...] = jnp.zeros_like(a_foc)
            a_int[...] = jnp.zeros_like(a_int)
            a_p[...] = jnp.zeros_like(a_p)
            a_t[...] = jnp.zeros_like(a_t)

        x = x_ref[...].astype(jnp.float32)
        t = t_ref[...].astype(jnp.float32)

        # EUP budget: one exp, one log, one approx reciprocal per element.
        e = jnp.exp(-jnp.abs(x))
        inv = pl.reciprocal(1.0 + e, approx=True)
        p = jnp.where(x >= 0.0, inv, e * inv)            # sigmoid(x)

        # Stable BCE-with-logits: max(x,0) - x*t + log(1 + exp(-|x|))
        bce = jnp.maximum(x, 0.0) - x * t + jnp.log1p(e)

        # Focal: t*log(p) + (1-t)*log(1-p) == -bce (stable form), so
        # focal = alpha_t * (1 - pt)^2 * bce   (alpha=0.25, gamma=2)
        pt = t * p + (1.0 - t) * (1.0 - p)
        d = 1.0 - pt
        alpha_t = 0.75 - 0.5 * t                         # 0.25*t + 0.75*(1-t)
        focal = alpha_t * d * d * bce

        inter = p * t                                    # padded t == 0 -> already masked

        if need_mask:
            col = k * tn + jax.lax.broadcasted_iota(jnp.int32, x.shape, 1)
            m = (col < n_true).astype(jnp.float32)
            bce = bce * m
            focal = focal * m
            p_sum_term = p * m
        else:
            p_sum_term = p

        # Pure-VPU elementwise accumulation across reduction steps.
        a_bce[...] += bce
        a_foc[...] += focal
        a_int[...] += inter
        a_p[...] += p_sum_term
        a_t[...] += t

        @pl.when(k == pl.num_programs(1) - 1)
        def _finalize():
            def _store(row, acc):
                s = jnp.sum(acc[...], axis=1, keepdims=True)      # (tb, 1)
                out_ref[row] = jnp.broadcast_to(s, (tb, _LANE))   # lane-dense store
            _store(0, a_bce)
            _store(1, a_foc)
            _store(2, a_int)
            _store(3, a_p)
            _store(4, a_t)

    out = pl.pallas_call(
        kernel,
        out_shape=jax.ShapeDtypeStruct((5, B, _LANE), jnp.float32),
        grid_spec=pltpu.PrefetchScalarGridSpec(
            num_scalar_prefetch=0,
            grid=(nb, nk),
            in_specs=[
                pl.BlockSpec((tb, tn), lambda b, k: (b, k)),
                pl.BlockSpec((tb, tn), lambda b, k: (b, k)),
            ],
            out_specs=pl.BlockSpec((5, tb, _LANE), lambda b, k: (0, b, 0)),
            scratch_shapes=[pltpu.VMEM((tb, tn), jnp.float32) for _ in range(5)],
        ),
        compiler_params=pltpu.CompilerParams(
            dimension_semantics=("parallel", "arbitrary"),
        ),
    )(logits_flat, targets_flat)
    return out[:, :, 0]  # (5, B)


def enhanced_combined_loss(logits, targets, model_params=None,
                           bce_weight=0.3, dice_weight=0.5,
                           focal_weight=0.2, reg_weight=1e-4,
                           dice_smooth=1e-6):
    """Forward pass of EnhancedCombinedLoss.

    logits:  [B, C, H, W] (any float dtype)
    targets: [B, H, W] or [B, C, H, W] (float / bool / int)
    """
    if targets.ndim == 3:
        targets = targets[:, None, :, :]

    B = logits.shape[0]
    N = int(logits.size) // B
    # Keep native dtypes on the HBM side; the kernel casts to f32 after load.
    logits_flat = logits.reshape(B, N)
    targets_flat = targets.reshape(B, N)

    sums = _loss_sums(logits_flat, targets_flat)  # (5, B)

    total_elems = jnp.float32(B * N)
    bce_loss = jnp.sum(sums[0]) / total_elems
    focal_loss = jnp.sum(sums[1]) / total_elems

    dice = (2.0 * sums[2] + dice_smooth) / (sums[3] + sums[4] + dice_smooth)
    dice_loss = 1.0 - jnp.mean(dice)

    # L2 regularization over 'weight' parameters (model=None in the reference usage).
    reg_loss = jnp.float32(0.0)
    if model_params is not None and reg_weight > 0:
        for name, param in model_params.items():
            if "weight" in name:
                reg_loss = reg_loss + jnp.linalg.norm(param.reshape(-1), 2)

    # TODO(synk): the PyTorch forward also builds a pos_weight-ed BCEWithLogitsLoss
    # ("bce_with_weight") but never uses it; intentionally omitted (dead code).
    return (bce_weight * bce_loss
            + dice_weight * jnp.abs(dice_loss)
            + focal_weight * focal_loss
            + reg_weight * reg_loss)


def _reference(logits, targets):
    # Pure-JAX reference matching the PyTorch module semantics.
    if targets.ndim == 3:
        targets = targets[:, None, :, :]
    t = targets.astype(jnp.float32)
    x = logits.astype(jnp.float32)
    p = jax.nn.sigmoid(x)
    bce = jnp.mean(jnp.maximum(x, 0.0) - x * t + jnp.log1p(jnp.exp(-jnp.abs(x))))
    B = x.shape[0]
    pf = p.reshape(B, -1)
    tf = t.reshape(B, -1)
    inter = jnp.sum(pf * tf, axis=1)
    union = jnp.sum(pf, axis=1) + jnp.sum(tf, axis=1)
    dice = 1.0 - jnp.mean((2.0 * inter + 1e-6) / (union + 1e-6))
    eps = 1e-6
    pt = t * p + (1 - t) * (1 - p)
    fw = (1 - pt) ** 2
    alpha_t = 0.25 * t + 0.75 * (1 - t)
    fbce = -alpha_t * (t * jnp.log(jnp.maximum(p, eps))
                       + (1 - t) * jnp.log(jnp.maximum(1 - p, eps)))
    focal = jnp.mean(fw * fbce)
    return 0.3 * bce + 0.5 * jnp.abs(dice) + 0.2 * focal


if __name__ == "__main__":
    def _check(B, C, H, W, key):
        k1, k2 = jax.random.split(key)
        logits = jax.random.normal(k1, (B, C, H, W), dtype=jnp.float32) * 2.0
        targets = (jax.random.uniform(k2, (B, H, W)) > 0.5).astype(jnp.float32)
        out = jax.block_until_ready(enhanced_combined_loss(logits, targets, model_params=None))
        ref = jax.block_until_ready(_reference(logits, targets))
        # tolerance accounts for the approx reciprocal (EUP) in the kernel
        assert jnp.allclose(out, ref, rtol=5e-3, atol=5e-4), ((B, C, H, W), out, ref)

    key = jax.random.PRNGKey(0)
    # primary shape (matches module usage: [B,1,H,W] logits, [B,H,W] targets)
    key, sub = jax.random.split(key); _check(2, 1, 16, 16, sub)
    # multi-tile reduction axis + lane padding/masking path (N=2304 -> 2 tiles of 2048)
    key, sub = jax.random.split(key); _check(2, 1, 48, 48, sub)
    # batch divisible by 8 -> tb=8, parallel batch grid axis
    key, sub = jax.random.split(key); _check(16, 1, 16, 16, sub)

    print("KERNEL_OK")
</pallas_src>

<mosaic_0001>
module attributes {stable_mosaic.version = 11 : i64} {
  func.func @kernel(%arg0: i32, %arg1: i32, %arg2: memref<2x256xf32, #tpu.memory_space<vmem>>, %arg3: memref<2x256xf32, #tpu.memory_space<vmem>>, %arg4: memref<5x2x128xf32, #tpu.memory_space<vmem>>, %arg5: memref<2x256xf32, #tpu.memory_space<vmem>>, %arg6: memref<2x256xf32, #tpu.memory_space<vmem>>, %arg7: memref<2x256xf32, #tpu.memory_space<vmem>>, %arg8: memref<2x256xf32, #tpu.memory_space<vmem>>, %arg9: memref<2x256xf32, #tpu.memory_space<vmem>>) attributes {dimension_semantics = [#tpu.dimension_semantics<parallel>, #tpu.dimension_semantics<arbitrary>], iteration_bounds = array<i64: 1, 1>, scalar_prefetch = 0 : i64, scratch_operands = 5 : i64, tpu.core_type = #tpu.core_type<tc>, window_params = [{transform_indices = @transform_0, window_bounds = array<i64: 2, 256>}, {transform_indices = @transform_1, window_bounds = array<i64: 2, 256>}, {transform_indices = @transform_2, window_bounds = array<i64: 5, 2, 128>}]} {
    %c0_i32 = arith.constant 0 : i32
    %0 = arith.cmpi eq, %arg1, %c0_i32 : i32
    %1 = arith.extui %0 : i1 to i32
    %c0_i32_0 = arith.constant 0 : i32
    %2 = arith.cmpi ne, %1, %c0_i32_0 : i32
    scf.if %2 {
      %cst_34 = arith.constant 0.000000e+00 : f32
      %57 = vector.broadcast %cst_34 : f32 to vector<2x256xf32>
      %c0_35 = arith.constant 0 : index
      %c0_36 = arith.constant 0 : index
      %58 = vector.load %arg5[%c0_35, %c0_36] : memref<2x256xf32, #tpu.memory_space<vmem>>, vector<2x256xf32>
      tpu.vector_store %arg5[%c0_35, %c0_36], %57 {strides = array<i32>} : memref<2x256xf32, #tpu.memory_space<vmem>>, vector<2x256xf32>,
      %cst_37 = arith.constant 0.000000e+00 : f32
      %59 = vector.broadcast %cst_37 : f32 to vector<2x256xf32>
      %c0_38 = arith.constant 0 : index
      %c0_39 = arith.constant 0 : index
      %60 = vector.load %arg6[%c0_38, %c0_39] : memref<2x256xf32, #tpu.memory_space<vmem>>, vector<2x256xf32>
      tpu.vector_store %arg6[%c0_38, %c0_39], %59 {strides = array<i32>} : memref<2x256xf32, #tpu.memory_space<vmem>>, vector<2x256xf32>,
      %cst_40 = arith.constant 0.000000e+00 : f32
      %61 = vector.broadcast %cst_40 : f32 to vector<2x256xf32>
      %c0_41 = arith.constant 0 : index
      %c0_42 = arith.constant 0 : index
      %62 = vector.load %arg7[%c0_41, %c0_42] : memref<2x256xf32, #tpu.memory_space<vmem>>, vector<2x256xf32>
      tpu.vector_store %arg7[%c0_41, %c0_42], %61 {strides = array<i32>} : memref<2x256xf32, #tpu.memory_space<vmem>>, vector<2x256xf32>,
      %cst_43 = arith.constant 0.000000e+00 : f32
      %63 = vector.broadcast %cst_43 : f32 to vector<2x256xf32>
      %c0_44 = arith.constant 0 : index
      %c0_45 = arith.constant 0 : index
      %64 = vector.load %arg8[%c0_44, %c0_45] : memref<2x256xf32, #tpu.memory_space<vmem>>, vector<2x256xf32>
      tpu.vector_store %arg8[%c0_44, %c0_45], %63 {strides = array<i32>} : memref<2x256xf32, #tpu.memory_space<vmem>>, vector<2x256xf32>,
      %cst_46 = arith.constant 0.000000e+00 : f32
      %65 = vector.broadcast %cst_46 : f32 to vector<2x256xf32>
      %c0_47 = arith.constant 0 : index
      %c0_48 = arith.constant 0 : index
      %66 = vector.load %arg9[%c0_47, %c0_48] : memref<2x256xf32, #tpu.memory_space<vmem>>, vector<2x256xf32>
      tpu.vector_store %arg9[%c0_47, %c0_48], %65 {strides = array<i32>} : memref<2x256xf32, #tpu.memory_space<vmem>>, vector<2x256xf32>,
    } else {
    }
    %c0 = arith.constant 0 : index
    %c0_1 = arith.constant 0 : index
    %3 = vector.load %arg2[%c0, %c0_1] : memref<2x256xf32, #tpu.memory_space<vmem>>, vector<2x256xf32>
    %c0_2 = arith.constant 0 : index
    %c0_3 = arith.constant 0 : index
    %4 = vector.load %arg3[%c0_2, %c0_3] : memref<2x256xf32, #tpu.memory_space<vmem>>, vector<2x256xf32>
    %5 = math.absf %3 : vector<2x256xf32>
    %cst = arith.constant 0.000000e+00 : f32
    %6 = vector.broadcast %cst : f32 to vector<2x256xf32>
    %7 = arith.subf %6, %5 : vector<2x256xf32>
    %8 = math.exp %7 : vector<2x256xf32>
    %cst_4 = arith.constant 1.000000e+00 : f32
    %9 = vector.broadcast %cst_4 : f32 to vector<2x256xf32>
    %10 = arith.addf %9, %8 : vector<2x256xf32>
    %11 = tpu.reciprocal %10 {approx = true} : vector<2x256xf32> -> vector<2x256xf32>
    %cst_5 = arith.constant 0.000000e+00 : f32
    %12 = vector.broadcast %cst_5 : f32 to vector<2x256xf32>
    %13 = arith.cmpf oge, %3, %12 : vector<2x256xf32>
    %14 = arith.mulf %8, %11 : vector<2x256xf32>
    %15 = arith.select %13, %11, %14 : vector<2x256xi1>, vector<2x256xf32>
    %cst_6 = arith.constant 0.000000e+00 : f32
    %16 = vector.broadcast %cst_6 : f32 to vector<2x256xf32>
    %17 = arith.maximumf %3, %16 : vector<2x256xf32>
    %18 = arith.mulf %3, %4 : vector<2x256xf32>
    %19 = arith.subf %17, %18 : vector<2x256xf32>
    %20 = math.log1p %8 : vector<2x256xf32>
    %21 = arith.addf %19, %20 : vector<2x256xf32>
    %22 = arith.mulf %4, %15 : vector<2x256xf32>
    %cst_7 = arith.constant 1.000000e+00 : f32
    %23 = vector.broadcast %cst_7 : f32 to vector<2x256xf32>
    %24 = arith.subf %23, %4 : vector<2x256xf32>
    %cst_8 = arith.constant 1.000000e+00 : f32
    %25 = vector.broadcast %cst_8 : f32 to vector<2x256xf32>
    %26 = arith.subf %25, %15 : vector<2x256xf32>
    %27 = arith.mulf %24, %26 : vector<2x256xf32>
    %28 = arith.addf %22, %27 : vector<2x256xf32>
    %cst_9 = arith.constant 1.000000e+00 : f32
    %29 = vector.broadcast %cst_9 : f32 to vector<2x256xf32>
    %30 = arith.subf %29, %28 : vector<2x256xf32>
    %cst_10 = arith.constant 5.000000e-01 : f32
    %31 = vector.broadcast %cst_10 : f32 to vector<2x256xf32>
    %32 = arith.mulf %31, %4 : vector<2x256xf32>
    %cst_11 = arith.constant 7.500000e-01 : f32
    %33 = vector.broadcast %cst_11 : f32 to vector<2x256xf32>
    %34 = arith.subf %33, %32 : vector<2x256xf32>
    %35 = arith.mulf %34, %30 : vector<2x256xf32>
    %36 = arith.mulf %35, %30 : vector<2x256xf32>
    %37 = arith.mulf %36, %21 : vector<2x256xf32>
    %38 = arith.mulf %15, %4 : vector<2x256xf32>
    %c0_12 = arith.constant 0 : index
    %c0_13 = arith.constant 0 : index
    %39 = vector.load %arg5[%c0_12, %c0_13] : memref<2x256xf32, #tpu.memory_space<vmem>>, vector<2x256xf32>
    %40 = arith.addf %39, %21 : vector<2x256xf32>
    %c0_14 = arith.constant 0 : index
    %c0_15 = arith.constant 0 : index
    %41 = vector.load %arg5[%c0_14, %c0_15] : memref<2x256xf32, #tpu.memory_space<vmem>>, vector<2x256xf32>
    tpu.vector_store %arg5[%c0_14, %c0_15], %40 {strides = array<i32>} : memref<2x256xf32, #tpu.memory_space<vmem>>, vector<2x256xf32>,
    %c0_16 = arith.constant 0 : index
    %c0_17 = arith.constant 0 : index
    %42 = vector.load %arg6[%c0_16, %c0_17] : memref<2x256xf32, #tpu.memory_space<vmem>>, vector<2x256xf32>
    %43 = arith.addf %42, %37 : vector<2x256xf32>
    %c0_18 = arith.constant 0 : index
    %c0_19 = arith.constant 0 : index
    %44 = vector.load %arg6[%c0_18, %c0_19] : memref<2x256xf32, #tpu.memory_space<vmem>>, vector<2x256xf32>
    tpu.vector_store %arg6[%c0_18, %c0_19], %43 {strides = array<i32>} : memref<2x256xf32, #tpu.memory_space<vmem>>, vector<2x256xf32>,
    %c0_20 = arith.constant 0 : index
    %c0_21 = arith.constant 0 : index
    %45 = vector.load %arg7[%c0_20, %c0_21] : memref<2x256xf32, #tpu.memory_space<vmem>>, vector<2x256xf32>
    %46 = arith.addf %45, %38 : vector<2x256xf32>
    %c0_22 = arith.constant 0 : index
    %c0_23 = arith.constant 0 : index
    %47 = vector.load %arg7[%c0_22, %c0_23] : memref<2x256xf32, #tpu.memory_space<vmem>>, vector<2x256xf32>
    tpu.vector_store %arg7[%c0_22, %c0_23], %46 {strides = array<i32>} : memref<2x256xf32, #tpu.memory_space<vmem>>, vector<2x256xf32>,
    %c0_24 = arith.constant 0 : index
    %c0_25 = arith.constant 0 : index
    %48 = vector.load %arg8[%c0_24, %c0_25] : memref<2x256xf32, #tpu.memory_space<vmem>>, vector<2x256xf32>
    %49 = arith.addf %48, %15 : vector<2x256xf32>
    %c0_26 = arith.constant 0 : index
    %c0_27 = arith.constant 0 : index
    %50 = vector.load %arg8[%c0_26, %c0_27] : memref<2x256xf32, #tpu.memory_space<vmem>>, vector<2x256xf32>
    tpu.vector_store %arg8[%c0_26, %c0_27], %49 {strides = array<i32>} : memref<2x256xf32, #tpu.memory_space<vmem>>, vector<2x256xf32>,
    %c0_28 = arith.constant 0 : index
    %c0_29 = arith.constant 0 : index
    %51 = vector.load %arg9[%c0_28, %c0_29] : memref<2x256xf32, #tpu.memory_space<vmem>>, vector<2x256xf32>
    %52 = arith.addf %51, %4 : vector<2x256xf32>
    %c0_30 = arith.constant 0 : index
    %c0_31 = arith.constant 0 : index
    %53 = vector.load %arg9[%c0_30, %c0_31] : memref<2x256xf32, #tpu.memory_space<vmem>>, vector<2x256xf32>
    tpu.vector_store %arg9[%c0_30, %c0_31], %52 {strides = array<i32>} : memref<2x256xf32, #tpu.memory_space<vmem>>, vector<2x256xf32>,
    %c0_i32_32 = arith.constant 0 : i32
    %54 = arith.cmpi eq, %arg1, %c0_i32_32 : i32
    %55 = arith.extui %54 : i1 to i32
    %c0_i32_33 = arith.constant 0 : i32
    %56 = arith.cmpi ne, %55, %c0_i32_33 : i32
    scf.if %56 {
      %c0_34 = arith.constant 0 : index
      %c0_35 = arith.constant 0 : index
      %57 = vector.load %arg5[%c0_34, %c0_35] : memref<2x256xf32, #tpu.memory_space<vmem>>, vector<2x256xf32>
      %cst_36 = arith.constant dense<0.000000e+00> : vector<2xf32>
      %58 = vector.multi_reduction <add>, %57, %cst_36 [1] : vector<2x256xf32> to vector<2xf32>
      %59 = vector.shape_cast %58 : vector<2xf32> to vector<2x1xf32>
      %60 = vector.shape_cast %59 : vector<2x1xf32> to vector<2x1xf32>
      %61 = vector.broadcast %60 : vector<2x1xf32> to vector<2x128xf32>
      %c0_37 = arith.constant 0 : index
      %c0_38 = arith.constant 0 : index
      %c0_39 = arith.constant 0 : index
      %62 = vector.load %arg4[%c0_37, %c0_38, %c0_39] : memref<5x2x128xf32, #tpu.memory_space<vmem>>, vector<1x2x128xf32>
      %63 = vector.shape_cast %62 : vector<1x2x128xf32> to vector<2x128xf32>
      %64 = vector.shape_cast %61 : vector<2x128xf32> to vector<1x2x128xf32>
      tpu.vector_store %arg4[%c0_37, %c0_38, %c0_39], %64 {strides = array<i32>} : memref<5x2x128xf32, #tpu.memory_space<vmem>>, vector<1x2x128xf32>,
      %c0_40 = arith.constant 0 : index
      %c0_41 = arith.constant 0 : index
      %65 = vector.load %arg6[%c0_40, %c0_41] : memref<2x256xf32, #tpu.memory_space<vmem>>, vector<2x256xf32>
      %cst_42 = arith.constant dense<0.000000e+00> : vector<2xf32>
      %66 = vector.multi_reduction <add>, %65, %cst_42 [1] : vector<2x256xf32> to vector<2xf32>
      %67 = vector.shape_cast %66 : vector<2xf32> to vector<2x1xf32>
      %68 = vector.shape_cast %67 : vector<2x1xf32> to vector<2x1xf32>
      %69 = vector.broadcast %68 : vector<2x1xf32> to vector<2x128xf32>
      %c1 = arith.constant 1 : index
      %c0_43 = arith.constant 0 : index
      %c0_44 = arith.constant 0 : index
      %70 = vector.load %arg4[%c1, %c0_43, %c0_44] : memref<5x2x128xf32, #tpu.memory_space<vmem>>, vector<1x2x128xf32>
      %71 = vector.shape_cast %70 : vector<1x2x128xf32> to vector<2x128xf32>
      %72 = vector.shape_cast %69 : vector<2x128xf32> to vector<1x2x128xf32>
      tpu.vector_store %arg4[%c1, %c0_43, %c0_44], %72 {strides = array<i32>} : memref<5x2x128xf32, #tpu.memory_space<vmem>>, vector<1x2x128xf32>,
      %c0_45 = arith.constant 0 : index
      %c0_46 = arith.constant 0 : index
      %73 = vector.load %arg7[%c0_45, %c0_46] : memref<2x256xf32, #tpu.memory_space<vmem>>, vector<2x256xf32>
      %cst_47 = arith.constant dense<0.000000e+00> : vector<2xf32>
      %74 = vector.multi_reduction <add>, %73, %cst_47 [1] : vector<2x256xf32> to vector<2xf32>
      %75 = vector.shape_cast %74 : vector<2xf32> to vector<2x1xf32>
      %76 = vector.shape_cast %75 : vector<2x1xf32> to vector<2x1xf32>
      %77 = vector.broadcast %76 : vector<2x1xf32> to vector<2x128xf32>
      %c2 = arith.constant 2 : index
      %c0_48 = arith.constant 0 : index
      %c0_49 = arith.constant 0 : index
      %78 = vector.load %arg4[%c2, %c0_48, %c0_49] : memref<5x2x128xf32, #tpu.memory_space<vmem>>, vector<1x2x128xf32>
      %79 = vector.shape_cast %78 : vector<1x2x128xf32> to vector<2x128xf32>
      %80 = vector.shape_cast %77 : vector<2x128xf32> to vector<1x2x128xf32>
      tpu.vector_store %arg4[%c2, %c0_48, %c0_49], %80 {strides = array<i32>} : memref<5x2x128xf32, #tpu.memory_space<vmem>>, vector<1x2x128xf32>,
      %c0_50 = arith.constant 0 : index
      %c0_51 = arith.constant 0 : index
      %81 = vector.load %arg8[%c0_50, %c0_51] : memref<2x256xf32, #tpu.memory_space<vmem>>, vector<2x256xf32>
      %cst_52 = arith.constant dense<0.000000e+00> : vector<2xf32>
      %82 = vector.multi_reduction <add>, %81, %cst_52 [1] : vector<2x256xf32> to vector<2xf32>
      %83 = vector.shape_cast %82 : vector<2xf32> to vector<2x1xf32>
      %84 = vector.shape_cast %83 : vector<2x1xf32> to vector<2x1xf32>
      %85 = vector.broadcast %84 : vector<2x1xf32> to vector<2x128xf32>
      %c3 = arith.constant 3 : index
      %c0_53 = arith.constant 0 : index
      %c0_54 = arith.constant 0 : index
      %86 = vector.load %arg4[%c3, %c0_53, %c0_54] : memref<5x2x128xf32, #tpu.memory_space<vmem>>, vector<1x2x128xf32>
      %87 = vector.shape_cast %86 : vector<1x2x128xf32> to vector<2x128xf32>
      %88 = vector.shape_cast %85 : vector<2x128xf32> to vector<1x2x128xf32>
      tpu.vector_store %arg4[%c3, %c0_53, %c0_54], %88 {strides = array<i32>} : memref<5x2x128xf32, #tpu.memory_space<vmem>>, vector<1x2x128xf32>,
      %c0_55 = arith.constant 0 : index
      %c0_56 = arith.constant 0 : index
      %89 = vector.load %arg9[%c0_55, %c0_56] : memref<2x256xf32, #tpu.memory_space<vmem>>, vector<2x256xf32>
      %cst_57 = arith.constant dense<0.000000e+00> : vector<2xf32>
      %90 = vector.multi_reduction <add>, %89, %cst_57 [1] : vector<2x256xf32> to vector<2xf32>
      %91 = vector.shape_cast %90 : vector<2xf32> to vector<2x1xf32>
      %92 = vector.shape_cast %91 : vector<2x1xf32> to vector<2x1xf32>
      %93 = vector.broadcast %92 : vector<2x1xf32> to vector<2x128xf32>
      %c4 = arith.constant 4 : index
      %c0_58 = arith.constant 0 : index
      %c0_59 = arith.constant 0 : index
      %94 = vector.load %arg4[%c4, %c0_58, %c0_59] : memref<5x2x128xf32, #tpu.memory_space<vmem>>, vector<1x2x128xf32>
      %95 = vector.shape_cast %94 : vector<1x2x128xf32> to vector<2x128xf32>
      %96 = vector.shape_cast %93 : vector<2x128xf32> to vector<1x2x128xf32>
      tpu.vector_store %arg4[%c4, %c0_58, %c0_59], %96 {strides = array<i32>} : memref<5x2x128xf32, #tpu.memory_space<vmem>>, vector<1x2x128xf32>,
    } else {
    }
    return
  }
  func.func @transform_0(%arg0: i32, %arg1: i32) -> (i32, i32) {
    %c0_i32 = arith.constant 0 : i32
    return %arg0, %arg1 : i32, i32
  }
  func.func @transform_1(%arg0: i32, %arg1: i32) -> (i32, i32) {
    %c0_i32 = arith.constant 0 : i32
    return %arg0, %arg1 : i32, i32
  }
  func.func @transform_2(%arg0: i32, %arg1: i32) -> (i32, i32, i32) {
    %c0_i32 = arith.constant 0 : i32
    %c0_i32_0 = arith.constant 0 : i32
    %c0_i32_1 = arith.constant 0 : i32
    return %c0_i32, %arg0, %c0_i32_0 : i32, i32, i32
  }
}

</mosaic_0001>

<llo_original>
// kernel: tpu_custom_call.1
$region0: #{tpu_custom_call.1}
  #allocation0 [shape = 'u32[]', space=smem, size = 0x4, offset = 0x4, fixed_abs, tag = 'smem constant byte address 0x4 - core index']
  #allocation1 [shape = 'u32[144,128]{1,0:T(1,128)}', space=vmem, size = 0x12000, scoped, tag = 'internal scratch']
  #allocation2 [shape = 'f32[2,256]{1,0:T(2,128)}', space=vmem, size = 0x800, scoped, tag = 'scratch operand']
  #allocation3 [shape = 'f32[2,256]{1,0:T(2,128)}', space=vmem, size = 0x800, scoped, tag = 'scratch operand']
  #allocation4 [shape = 'f32[2,256]{1,0:T(2,128)}', space=vmem, size = 0x800, scoped, tag = 'scratch operand']
  #allocation5 [shape = 'f32[2,256]{1,0:T(2,128)}', space=vmem, size = 0x800, scoped, tag = 'scratch operand']
  #allocation6 [shape = 'f32[2,256]{1,0:T(2,128)}', space=vmem, size = 0x800, scoped, tag = 'scratch operand']
  %s0 = inlined_call_operand.hbm [shape: f32[2,256], index: 0, kind: input, shape index: {}]
  %s1 = inlined_call_operand.hbm [shape: f32[2,256], index: 1, kind: input, shape index: {}]
  %s2 = inlined_call_operand.hbm [shape: f32[5,2,128], index: 2, kind: output, shape index: {}]
  %s3 = sld [smem:[#allocation0]]
  $region34: #{tpu_custom_call.1} parent=0
    _
  %s5 = ssub.s32 1, %s3
  %s6 = scalar_select 0, %s5, %s3
  $region1: #{tpu_custom_call.1} parent=0
    #allocation7 [shape = 'u8[2048]{0}', space=vmem, size = 0x800, scoped, tag = 'input window, operand 0, single buffered']
    #allocation8 [shape = 's32[1]{0}', space=sflag, size = 0x4, scoped, tag = 'scoped memory for tpu_custom_call.1']
    #allocation9 [shape = 's32[1]{0}', space=sflag, size = 0x4, scoped, tag = 'scoped memory for tpu_custom_call.1']
    #allocation10 [shape = 'u8[2048]{0}', space=vmem, size = 0x800, scoped, tag = 'input window, operand 1, single buffered']
    #allocation11 [shape = 's32[1]{0}', space=sflag, size = 0x4, scoped, tag = 'scoped memory for tpu_custom_call.1']
    #allocation12 [shape = 'u8[5120]{0}', space=vmem, size = 0x1400, scoped, tag = 'output window, operand 0, single buffered']
    %7 = vsyncpa [#allocation8], 0
    %8 = vsyncpa [#allocation11], 0
    %9 = vsyncpa [#allocation9], 0
    // Predicated region
    $region2: #{tpu_custom_call.1} parent=1 // pred_check
      _
    $region3: #{tpu_custom_call.1} parent=1 // pred_check_branch
      %11 = sbr.rel (0) target = $region5
    $region4: #{tpu_custom_call.1} parent=1 // pred_region
      %s13 = ssub.s32 64, 64
      %14 = vsyncadd [#allocation8], %s13
      %s16 = sshll.u32 [#allocation7], 4
      %s17 = int_to_ptr.vmem [resolvable:$true] %s16
      %19 = dma.hbm_to_vmem [thread:$0]  %s0, 64, %s17, [#allocation8]
    $region5: #{tpu_custom_call.1} parent=1 // pred_fallthru
      _
    // Predicated region
    $region6: #{tpu_custom_call.1} parent=1 // pred_check
      _
    $region7: #{tpu_custom_call.1} parent=1 // pred_check_branch
      %21 = sbr.rel (0) target = $region9
    $region8: #{tpu_custom_call.1} parent=1 // pred_region
      %s23 = ssub.s32 64, 64
      %24 = vsyncadd [#allocation11], %s23
      %s26 = sshll.u32 [#allocation10], 4
      %s27 = int_to_ptr.vmem [resolvable:$true] %s26
      %29 = dma.hbm_to_vmem [thread:$0]  %s1, 64, %s27, [#allocation11]
    $region9: #{tpu_custom_call.1} parent=1 // pred_fallthru
      _
    // Predicated region
    $region10: #{tpu_custom_call.1} parent=1 // pred_check
      _
    $region11: #{tpu_custom_call.1} parent=1 // pred_check_branch
      %31 = sbr.rel (0) target = $region13
    $region12: #{tpu_custom_call.1} parent=1 // pred_region
      %32 = dma.done [#allocation8], 64
    $region13: #{tpu_custom_call.1} parent=1 // pred_fallthru
      _
    // Predicated region
    $region14: #{tpu_custom_call.1} parent=1 // pred_check
      _
    $region15: #{tpu_custom_call.1} parent=1 // pred_check_branch
      %34 = sbr.rel (0) target = $region17
    $region16: #{tpu_custom_call.1} parent=1 // pred_region
      %35 = dma.done [#allocation11], 64
    $region17: #{tpu_custom_call.1} parent=1 // pred_fallthru
      _
    %p36 = scmp.eq.s32.totalorder 0, 0
    // Predicated region
    $region18: #{tpu_custom_call.1} parent=1 // pred_check
      %p37 = pneg %p36
    $region19: #{tpu_custom_call.1} parent=1 // pred_check_branch
      %39 = sbr.rel (%p37) target = $region21
    $region20: #{tpu_custom_call.1} parent=1 // pred_region
      %40 = vst [vmem:[#allocation2] sm:$0xf] 0.0
      %41 = vst [vmem:[#allocation3] sm:$0xf] 0.0
      %42 = vst [vmem:[#allocation4] sm:$0xf] 0.0
      %43 = vst [vmem:[#allocation5] sm:$0xf] 0.0
      %44 = vst [vmem:[#allocation6] sm:$0xf] 0.0
    $region21: #{tpu_custom_call.1} parent=1 // pred_fallthru
      _
    %v45 = vld [vmem:[#allocation7] sm:$0xf]
    %v46 = vld [vmem:[#allocation10] sm:$0xf]
    %v47 = vand.u32 2147483647, %v45
    %v48 = vsub.f32 0.0, %v47
    %v49 = vmul.f32 %v48, 1.442695
    %v50 = vpow.pop %v49
    %v51 = vadd.f32 %v50, 1.0
    %v52 = vrcp.pop %v51
    %vm53 = vcmp.ge.f32.partialorder %v45, 0.0
    %v54 = vmul.f32 %v50, %v52
    %v55 = vsel %vm53, %v52, %v54
    %v56 = vmax.f32 %v45, 0.0
    %v57 = vmul.f32 %v45, %v46
    %v58 = vsub.f32 %v56, %v57
    %v59 = vadd.f32 %v50, 1.0
    %v60 = vlog2.pop %v59
    %v61 = vmul.f32 %v60, 0.6931472
    %v62 = vmul.f32 -0.5, %v50
    %v63 = vadd.f32 %v62, 1.0
    %v64 = vmul.f32 %v63, %v50
    %v65 = vand.u32 2147483647, %v50
    %vm66 = vcmp.lt.f32.partialorder %v65, 0.0004427343
    %v67 = vsel %vm66, %v64, %v61
    %v68 = vadd.f32 %v58, %v67
    %v69 = vmul.f32 %v46, %v55
    %v70 = vsub.f32 1.0, %v46
    %v71 = vsub.f32 1.0, %v55
    %v72 = vmul.f32 %v70, %v71
    %v73 = vadd.f32 %v69, %v72
    %v74 = vsub.f32 1.0, %v73
    %v75 = vmul.f32 %v46, 0.5
    %v76 = vsub.f32 0.75, %v75
    %v77 = vmul.f32 %v76, %v74
    %v78 = vmul.f32 %v77, %v74
    %v79 = vmul.f32 %v78, %v68
    %v80 = vld [vmem:[#allocation2] sm:$0xf]
    %v81 = vadd.f32 %v80, %v68
    %82 = vst [vmem:[#allocation2] sm:$0xf] %v81
    %v83 = vld [vmem:[#allocation3] sm:$0xf]
    %v84 = vadd.f32 %v83, %v79
    %85 = vst [vmem:[#allocation3] sm:$0xf] %v84
    %v86 = vld [vmem:[#allocation4] sm:$0xf]
    %v87 = vadd.f32 %v86, %v69
    %88 = vst [vmem:[#allocation4] sm:$0xf] %v87
    %v89 = vld [vmem:[#allocation5] sm:$0xf]
    %v90 = vadd.f32 %v89, %v55
    %91 = vst [vmem:[#allocation5] sm:$0xf] %v90
    %v92 = vld [vmem:[#allocation6] sm:$0xf]
    %v93 = vadd.f32 %v92, %v46
    %94 = vst [vmem:[#allocation6] sm:$0xf] %v93
    // Predicated region
    $region22: #{tpu_custom_call.1} parent=1 // pred_check
      %p95 = pneg %p36
    $region23: #{tpu_custom_call.1} parent=1 // pred_check_branch
      %97 = sbr.rel (%p95) target = $region25
    $region24: #{tpu_custom_call.1} parent=1 // pred_region
      %v98 = vld [vmem:[#allocation2] sm:$0xf]
      %v101 = vunpack.c.l.s4 1983009808
      %v102 = vunpack.c.0.s8 %v101
      %v103 = vlaneseq
      %v104 = vshrl.u32 %v103, 7
      %v105 = vsub.s32 %v102, %v104
      %v106 = vrot.slane %v98, %v105
      %v107 = vcombine.high %v106, %v106
      %vm110 = vcmask 1041408
      %v111 = vsel %vm110, %v106, 0.0
      %v112 = vsel %vm110, %v107, 0.0
      %v113 = vadd.f32 %v111, %v112
      %114 = vadd.xlane.f32.xlu0 %v113
      %v115 = vpop.xlane.xlu0 %114
      %116 = vst [vmem:[#allocation12] sm:$0x3] %v115
      %v117 = vld [vmem:[#allocation3] sm:$0xf]
      %v120 = vunpack.c.l.s4 1983009808
      %v121 = vunpack.c.0.s8 %v120
      %v122 = vlaneseq
      %v123 = vshrl.u32 %v122, 7
      %v124 = vsub.s32 %v121, %v123
      %v125 = vrot.slane %v117, %v124
      %v126 = vcombine.high %v125, %v125
      %v129 = vsel %vm110, %v125, 0.0
      %v130 = vsel %vm110, %v126, 0.0
      %v131 = vadd.f32 %v129, %v130
      %132 = vadd.xlane.f32.xlu0 %v131
      %v133 = vpop.xlane.xlu0 %132
      %s134 = scalar_lea.vmem [#allocation12], 2
      %135 = vst [vmem:[%s134] sm:$0x3] %v133
      %v136 = vld [vmem:[#allocation4] sm:$0xf]
      %v139 = vunpack.c.l.s4 1983009808
      %v140 = vunpack.c.0.s8 %v139
      %v141 = vlaneseq
      %v142 = vshrl.u32 %v141, 7
      %v143 = vsub.s32 %v140, %v142
      %v144 = vrot.slane %v136, %v143
      %v145 = vcombine.high %v144, %v144
      %v148 = vsel %vm110, %v144, 0.0
      %v149 = vsel %vm110, %v145, 0.0
      %v150 = vadd.f32 %v148, %v149
      %151 = vadd.xlane.f32.xlu0 %v150
      %v152 = vpop.xlane.xlu0 %151
      %s153 = scalar_lea.vmem [#allocation12], 4
      %154 = vst [vmem:[%s153] sm:$0x3] %v152
      %v155 = vld [vmem:[#allocation5] sm:$0xf]
      %v158 = vunpack.c.l.s4 1983009808
      %v159 = vunpack.c.0.s8 %v158
      %v160 = vlaneseq
      %v161 = vshrl.u32 %v160, 7
      %v162 = vsub.s32 %v159, %v161
      %v163 = vrot.slane %v155, %v162
      %v164 = vcombine.high %v163, %v163
      %v167 = vsel %vm110, %v163, 0.0
      %v168 = vsel %vm110, %v164, 0.0
      %v169 = vadd.f32 %v167, %v168
      %170 = vadd.xlane.f32.xlu0 %v169
      %v171 = vpop.xlane.xlu0 %170
      %s172 = scalar_lea.vmem [#allocation12], 6
      %173 = vst [vmem:[%s172] sm:$0x3] %v171
      %v174 = vld [vmem:[#allocation6] sm:$0xf]
      %v177 = vunpack.c.l.s4 1983009808
      %v178 = vunpack.c.0.s8 %v177
      %v179 = vlaneseq
      %v180 = vshrl.u32 %v179, 7
      %v181 = vsub.s32 %v178, %v180
      %v182 = vrot.slane %v174, %v181
      %v183 = vcombine.high %v182, %v182
      %v186 = vsel %vm110, %v182, 0.0
      %v187 = vsel %vm110, %v183, 0.0
      %v188 = vadd.f32 %v186, %v187
      %189 = vadd.xlane.f32.xlu0 %v188
      %v190 = vpop.xlane.xlu0 %189
      %s191 = scalar_lea.vmem [#allocation12], 8
      %192 = vst [vmem:[%s191] sm:$0x3] %v190
    $region25: #{tpu_custom_call.1} parent=1 // pred_fallthru
      _
    // Predicated region
    $region26: #{tpu_custom_call.1} parent=1 // pred_check
      _
    $region27: #{tpu_custom_call.1} parent=1 // pred_check_branch
      %194 = sbr.rel (0) target = $region29
    $region28: #{tpu_custom_call.1} parent=1 // pred_region
      %s196 = ssub.s32 160, 160
      %197 = vsyncadd [#allocation9], %s196
      %s198 = sshll.u32 [#allocation12], 4
      %s199 = int_to_ptr.vmem [resolvable:$true] %s198
      %204 = dma.vmem_to_hbm [thread:$0]  %s199, 160, %s2, [#allocation9], 32, 32, 2
    $region29: #{tpu_custom_call.1} parent=1 // pred_fallthru
      _
    // Predicated region
    $region30: #{tpu_custom_call.1} parent=1 // pred_check
      _
    $region31: #{tpu_custom_call.1} parent=1 // pred_check_branch
      %206 = sbr.rel (0) target = $region33
    $region32: #{tpu_custom_call.1} parent=1 // pred_region
      %207 = dma.done [#allocation9], 160
    $region33: #{tpu_custom_call.1} parent=1 // pred_fallthru
      _
    %208 = vsyncpa [#allocation8], 1
    %209 = vsyncpa [#allocation11], 1
    %210 = vsyncpa [#allocation9], 1

</llo_original>
